<compile_context>
chip_gen: v6e
topology: v6e:2x2x1
jax: 0.10.0
libtpu: 0.0.40
codegen_flags: <defaults>
</compile_context>

<pallas_src>
import jax
import jax.numpy as jnp
from jax import lax
from jax.experimental import pallas as pl
from jax.experimental.pallas import tpu as pltpu


def tcn_attention(local_feature, global_feature, wq, wk, wv, bq, bk, bv):
    """Pallas TPU implementation of TCNAttention.forward.

    local_feature : (B, C_local, S)  float32  (PyTorch NCS layout)
    global_feature: (B, C_global, S) float32
    wq/wk/wv      : (D, H) with D = C_local + C_global, H = D // 2
                    (math convention y = x @ W + b, matching the reference)
    bq/bk/bv      : (H,)
    returns       : (B, 16, (H * S) // 16) float32
    """
    assert local_feature.ndim == 3 and global_feature.ndim == 3
    assert local_feature.shape[0] == global_feature.shape[0]
    assert local_feature.shape[2] == global_feature.shape[2]

    B, C_l, S = local_feature.shape
    C_g = global_feature.shape[1]
    D = C_l + C_g
    H = D // 2
    assert wq.shape == (D, H) and wk.shape == (D, H) and wv.shape == (D, H)
    assert (H * S) % 16 == 0
    new_seq = (H * S) // 16
    inv_sqrt_s = 1.0 / (float(S) ** 0.5)   # PyTorch: / query.size(-1)**0.5, query is (B, H, S)

    # When S == 16 the PyTorch view(B, new_seq, 16).transpose(1, 2) is exactly a
    # per-batch transpose of attended (H, S) -> (S, H); fold it into the kernel.
    fold_output = (S == 16)

    # ---- trace-time parameter prep (tiny; one small fused XLA op) ----------
    # Augmented QKV operator: rows [Wq^T; Wk^T; Wv^T], last column = bias, so
    # the kernel needs exactly one weight DMA and one MXU matmul (the bias is
    # picked up by a ones row appended to the activations).
    w_fused = jnp.concatenate([wq.T, wk.T, wv.T], axis=0)            # (3H, D)
    b_fused = jnp.concatenate([bq, bk, bv]).reshape(3 * H, 1)        # (3H, 1)
    w_aug = jnp.concatenate([w_fused, b_fused], axis=1)              # (3H, D+1)

    out_shape = (B, 16, new_seq) if fold_output else (B, H, S)

    def kernel(xl_ref, xg_ref, w_ref, o_ref):
        # Stage the whole batch as one (D+1, B*S) operand:
        #   sublanes: [local channels | global channels | ones (bias row)]
        #   lanes:    batch-major sequence index (b * S + s) -> fills lane axis.
        xl_all = jnp.concatenate([xl_ref[b] for b in range(B)], axis=1)   # (C_l, B*S)
        xg_all = jnp.concatenate([xg_ref[b] for b in range(B)], axis=1)   # (C_g, B*S)
        ones = jnp.ones((1, B * S), dtype=jnp.float32)
        x = jnp.concatenate([xl_all, xg_all, ones], axis=0)               # (D+1, B*S)

        # One fused QKV projection (+bias) for the whole batch: one MXU sequence.
        qkv = jnp.dot(w_ref[...], x, preferred_element_type=jnp.float32)  # (3H, B*S)
        q = qkv[0:H]
        k = qkv[H:2 * H]
        v = qkv[2 * H:3 * H]

        # Per-batch (H, H) attention; short unrolled loop (B is small & static).
        for b in range(B):
            lo, hi = b * S, (b + 1) * S
            qb = q[:, lo:hi]                                   # (H, S)
            kb = k[:, lo:hi]                                   # (H, S)
            vb = v[:, lo:hi]                                   # (H, S)

            # scores = Qb Kb^T / sqrt(S); scale applied AFTER the matmul to
            # match the reference rounding order (cost: one tiny VPU multiply).
            scores = lax.dot_general(
                qb, kb, (((1,), (1,)), ((), ())),
                preferred_element_type=jnp.float32) * inv_sqrt_s          # (H, H)

            # Exact, numerically-stable softmax (approx recip would break 1e-5).
            m = jnp.max(scores, axis=-1, keepdims=True)
            e = jnp.exp(scores - m)
            probs = e / jnp.sum(e, axis=-1, keepdims=True)                # (H, H)

            if fold_output:
                # attended^T = Vb^T @ Probs^T, produced directly by the MXU so
                # the module's trailing view+transpose needs no XLA kernel.
                o_ref[b] = lax.dot_general(
                    vb, probs, (((0,), (1,)), ((), ())),
                    preferred_element_type=jnp.float32)                   # (S, H) == (16, new_seq)
            else:
                o_ref[b] = jnp.dot(probs, vb,
                                   preferred_element_type=jnp.float32)    # (H, S)

    grid_spec = pltpu.PrefetchScalarGridSpec(
        num_scalar_prefetch=0,
        grid=(1,),                                              # whole problem = one step
        in_specs=[
            pl.BlockSpec((B, C_l, S), lambda i: (0, 0, 0)),     # local  (native NCS)
            pl.BlockSpec((B, C_g, S), lambda i: (0, 0, 0)),     # global (native NCS)
            pl.BlockSpec((3 * H, D + 1), lambda i: (0, 0)),     # fused [Wq;Wk;Wv | b]
        ],
        out_specs=pl.BlockSpec(out_shape, lambda i: (0, 0, 0)),
    )

    flops = (2 * (3 * H) * (D + 1) * (B * S)       # fused QKV projection
             + B * 2 * H * H * S                   # scores
             + B * 2 * H * H * S)                  # attend
    bytes_accessed = 4 * (B * C_l * S + B * C_g * S
                          + 3 * H * (D + 1)
                          + out_shape[0] * out_shape[1] * out_shape[2])

    attended = pl.pallas_call(
        kernel,
        out_shape=jax.ShapeDtypeStruct(out_shape, jnp.float32),
        grid_spec=grid_spec,
        compiler_params=pltpu.CompilerParams(
            dimension_semantics=("arbitrary",)),                # single step, single TC
        cost_estimate=pl.CostEstimate(
            flops=flops,
            transcendentals=B * H * H,
            bytes_accessed=bytes_accessed),
    )(local_feature, global_feature, w_aug)

    if fold_output:
        return attended                                         # already (B, 16, new_seq)

    # TODO(synk): for S != 16 the module's trailing view/transpose stays as
    # wrapper-side glue (a real XLA transpose); only S == 16 folds it in-kernel.
    return jnp.transpose(attended.reshape(B, new_seq, 16), (0, 2, 1))


def _reference(local_feature, global_feature, wq, wk, wv, bq, bk, bv):
    """Pure-JAX reference matching the PyTorch forward exactly."""
    combined = jnp.concatenate([local_feature, global_feature], axis=1)
    combined = jnp.transpose(combined, (0, 2, 1))               # (B, S, D)
    q = jnp.einsum('bsd,dh->bsh', combined, wq) + bq            # (B, S, H)
    k = jnp.einsum('bsd,dh->bsh', combined, wk) + bk
    v = jnp.einsum('bsd,dh->bsh', combined, wv) + bv
    qT = jnp.transpose(q, (0, 2, 1))                            # (B, H, S)
    kT = jnp.transpose(k, (0, 2, 1))
    vT = jnp.transpose(v, (0, 2, 1))
    scores = jnp.einsum('bhs,bgs->bhg', qT, kT) / (qT.shape[-1] ** 0.5)
    w = jax.nn.softmax(scores, axis=-1)
    att = jnp.einsum('bhg,bgs->bhs', w, vT)                     # (B, H, S)
    B, H, S = att.shape
    new_seq = (B * H * S) // (B * 16)
    return jnp.transpose(att.reshape(B, new_seq, 16), (0, 2, 1))


if __name__ == "__main__":
    # Small, forward-consistent shapes:
    #   local_feature_dim=12, global_feature_dim=20 -> combined D=32, H=16
    #   batch=2, seq=16 -> output (2, 16, 16)
    B, C_LOCAL, C_GLOBAL, S = 2, 12, 20, 16
    D = C_LOCAL + C_GLOBAL
    H = D // 2

    key = jax.random.PRNGKey(0)
    k_l, k_g, k_wq, k_wk, k_wv, k_bq, k_bk, k_bv = jax.random.split(key, 8)

    local_feature = jax.random.normal(k_l, (B, C_LOCAL, S), dtype=jnp.float32)
    global_feature = jax.random.normal(k_g, (B, C_GLOBAL, S), dtype=jnp.float32)

    # Deterministic Linear params (stored as (in, out) so y = x @ W + b).
    scale = 1.0 / (D ** 0.5)
    wq = jax.random.uniform(k_wq, (D, H), jnp.float32, -scale, scale)
    wk = jax.random.uniform(k_wk, (D, H), jnp.float32, -scale, scale)
    wv = jax.random.uniform(k_wv, (D, H), jnp.float32, -scale, scale)
    bq = jax.random.uniform(k_bq, (H,), jnp.float32, -scale, scale)
    bk = jax.random.uniform(k_bk, (H,), jnp.float32, -scale, scale)
    bv = jax.random.uniform(k_bv, (H,), jnp.float32, -scale, scale)

    fn = jax.jit(tcn_attention)
    out = fn(local_feature, global_feature, wq, wk, wv, bq, bk, bv)
    out = jax.block_until_ready(out)

    ref = _reference(local_feature, global_feature, wq, wk, wv, bq, bk, bv)
    assert out.shape == (B, 16, (H * S) // 16), out.shape
    assert jnp.allclose(out, ref, atol=1e-5, rtol=1e-5), "mismatch vs reference"

    print("KERNEL_OK")
</pallas_src>

<mosaic_0001>
module attributes {stable_mosaic.version = 11 : i64} {
  func.func @kernel(%arg0: i32, %arg1: memref<2x12x16xf32, #tpu.memory_space<vmem>>, %arg2: memref<2x20x16xf32, #tpu.memory_space<vmem>>, %arg3: memref<48x33xf32, #tpu.memory_space<vmem>>, %arg4: memref<2x16x16xf32, #tpu.memory_space<vmem>>) attributes {dimension_semantics = [#tpu.dimension_semantics<arbitrary>], iteration_bounds = array<i64: 1>, scalar_prefetch = 0 : i64, scratch_operands = 0 : i64, tpu.core_type = #tpu.core_type<tc>, window_params = [{pipeline_mode = #tpu.pipeline_mode<synchronous>, transform_indices = @transform_0, window_bounds = array<i64: 2, 12, 16>}, {pipeline_mode = #tpu.pipeline_mode<synchronous>, transform_indices = @transform_1, window_bounds = array<i64: 2, 20, 16>}, {pipeline_mode = #tpu.pipeline_mode<synchronous>, transform_indices = @transform_2, window_bounds = array<i64: 48, 33>}, {pipeline_mode = #tpu.pipeline_mode<synchronous>, transform_indices = @transform_3, window_bounds = array<i64: 2, 16, 16>}]} {
    %c0 = arith.constant 0 : index
    %c0_0 = arith.constant 0 : index
    %c0_1 = arith.constant 0 : index
    %0 = vector.load %arg1[%c0, %c0_0, %c0_1] : memref<2x12x16xf32, #tpu.memory_space<vmem>>, vector<1x12x16xf32>
    %1 = vector.shape_cast %0 : vector<1x12x16xf32> to vector<12x16xf32>
    %c1 = arith.constant 1 : index
    %c0_2 = arith.constant 0 : index
    %c0_3 = arith.constant 0 : index
    %2 = vector.load %arg1[%c1, %c0_2, %c0_3] : memref<2x12x16xf32, #tpu.memory_space<vmem>>, vector<1x12x16xf32>
    %3 = vector.shape_cast %2 : vector<1x12x16xf32> to vector<12x16xf32>
    %4 = tpu.concatenate %1, %3 in 1 : vector<12x16xf32>, vector<12x16xf32> -> vector<12x32xf32>
    %c0_4 = arith.constant 0 : index
    %c0_5 = arith.constant 0 : index
    %c0_6 = arith.constant 0 : index
    %5 = vector.load %arg2[%c0_4, %c0_5, %c0_6] : memref<2x20x16xf32, #tpu.memory_space<vmem>>, vector<1x20x16xf32>
    %6 = vector.shape_cast %5 : vector<1x20x16xf32> to vector<20x16xf32>
    %c1_7 = arith.constant 1 : index
    %c0_8 = arith.constant 0 : index
    %c0_9 = arith.constant 0 : index
    %7 = vector.load %arg2[%c1_7, %c0_8, %c0_9] : memref<2x20x16xf32, #tpu.memory_space<vmem>>, vector<1x20x16xf32>
    %8 = vector.shape_cast %7 : vector<1x20x16xf32> to vector<20x16xf32>
    %9 = tpu.concatenate %6, %8 in 1 : vector<20x16xf32>, vector<20x16xf32> -> vector<20x32xf32>
    %cst = arith.constant 1.000000e+00 : f32
    %10 = vector.broadcast %cst : f32 to vector<1x32xf32>
    %11 = tpu.concatenate %4, %9, %10 in 0 : vector<12x32xf32>, vector<20x32xf32>, vector<1x32xf32> -> vector<33x32xf32>
    %c0_10 = arith.constant 0 : index
    %c0_11 = arith.constant 0 : index
    %12 = vector.load %arg3[%c0_10, %c0_11] : memref<48x33xf32, #tpu.memory_space<vmem>>, vector<48x33xf32>
    %cst_12 = arith.constant dense<0.000000e+00> : vector<48x32xf32>
    %13 = tpu.matmul %12, %11, %cst_12 {dimension_numbers = #tpu.dot_dimension_numbers<[1], [0], [0], [1], [0, 0, 1, 1], [], []>} : vector<48x33xf32>, vector<33x32xf32>, vector<48x32xf32> -> vector<48x32xf32>
    %14 = vector.extract_strided_slice %13 {offsets = [0, 0], sizes = [16, 32], strides = [1, 1]} : vector<48x32xf32> to vector<16x32xf32>
    %15 = vector.extract_strided_slice %13 {offsets = [16, 0], sizes = [16, 32], strides = [1, 1]} : vector<48x32xf32> to vector<16x32xf32>
    %16 = vector.extract_strided_slice %13 {offsets = [32, 0], sizes = [16, 32], strides = [1, 1]} : vector<48x32xf32> to vector<16x32xf32>
    %17 = vector.extract_strided_slice %14 {offsets = [0, 0], sizes = [16, 16], strides = [1, 1]} : vector<16x32xf32> to vector<16x16xf32>
    %18 = vector.extract_strided_slice %15 {offsets = [0, 0], sizes = [16, 16], strides = [1, 1]} : vector<16x32xf32> to vector<16x16xf32>
    %19 = vector.extract_strided_slice %16 {offsets = [0, 0], sizes = [16, 16], strides = [1, 1]} : vector<16x32xf32> to vector<16x16xf32>
    %cst_13 = arith.constant dense<0.000000e+00> : vector<16x16xf32>
    %20 = tpu.matmul %17, %18, %cst_13 {dimension_numbers = #tpu.dot_dimension_numbers<[1], [1], [0], [0], [0, 0, 1, 0], [], []>} : vector<16x16xf32>, vector<16x16xf32>, vector<16x16xf32> -> vector<16x16xf32>
    %cst_14 = arith.constant 2.500000e-01 : f32
    %21 = vector.broadcast %cst_14 : f32 to vector<16x16xf32>
    %22 = arith.mulf %20, %21 : vector<16x16xf32>
    %cst_15 = arith.constant dense<0xFF800000> : vector<16xf32>
    %23 = vector.multi_reduction <maximumf>, %22, %cst_15 [1] : vector<16x16xf32> to vector<16xf32>
    %24 = vector.shape_cast %23 : vector<16xf32> to vector<16x1xf32>
    %25 = vector.broadcast %24 : vector<16x1xf32> to vector<16x16xf32>
    %26 = arith.subf %22, %25 : vector<16x16xf32>
    %27 = math.exp %26 : vector<16x16xf32>
    %cst_16 = arith.constant dense<0.000000e+00> : vector<16xf32>
    %28 = vector.multi_reduction <add>, %27, %cst_16 [1] : vector<16x16xf32> to vector<16xf32>
    %29 = vector.shape_cast %28 : vector<16xf32> to vector<16x1xf32>
    %30 = vector.broadcast %29 : vector<16x1xf32> to vector<16x16xf32>
    %31 = arith.divf %27, %30 : vector<16x16xf32>
    %cst_17 = arith.constant dense<0.000000e+00> : vector<16x16xf32>
    %32 = tpu.matmul %19, %31, %cst_17 {dimension_numbers = #tpu.dot_dimension_numbers<[0], [1], [1], [0], [0, 1, 1, 0], [], []>} : vector<16x16xf32>, vector<16x16xf32>, vector<16x16xf32> -> vector<16x16xf32>
    %c0_18 = arith.constant 0 : index
    %c0_19 = arith.constant 0 : index
    %c0_20 = arith.constant 0 : index
    %33 = vector.load %arg4[%c0_18, %c0_19, %c0_20] : memref<2x16x16xf32, #tpu.memory_space<vmem>>, vector<1x16x16xf32>
    %34 = vector.shape_cast %33 : vector<1x16x16xf32> to vector<16x16xf32>
    %35 = vector.shape_cast %32 : vector<16x16xf32> to vector<1x16x16xf32>
    tpu.vector_store %arg4[%c0_18, %c0_19, %c0_20], %35 {strides = array<i32>} : memref<2x16x16xf32, #tpu.memory_space<vmem>>, vector<1x16x16xf32>,
    %36 = vector.extract_strided_slice %14 {offsets = [0, 16], sizes = [16, 16], strides = [1, 1]} : vector<16x32xf32> to vector<16x16xf32>
    %37 = vector.extract_strided_slice %15 {offsets = [0, 16], sizes = [16, 16], strides = [1, 1]} : vector<16x32xf32> to vector<16x16xf32>
    %38 = vector.extract_strided_slice %16 {offsets = [0, 16], sizes = [16, 16], strides = [1, 1]} : vector<16x32xf32> to vector<16x16xf32>
    %cst_21 = arith.constant dense<0.000000e+00> : vector<16x16xf32>
    %39 = tpu.matmul %36, %37, %cst_21 {dimension_numbers = #tpu.dot_dimension_numbers<[1], [1], [0], [0], [0, 0, 1, 0], [], []>} : vector<16x16xf32>, vector<16x16xf32>, vector<16x16xf32> -> vector<16x16xf32>
    %cst_22 = arith.constant 2.500000e-01 : f32
    %40 = vector.broadcast %cst_22 : f32 to vector<16x16xf32>
    %41 = arith.mulf %39, %40 : vector<16x16xf32>
    %cst_23 = arith.constant dense<0xFF800000> : vector<16xf32>
    %42 = vector.multi_reduction <maximumf>, %41, %cst_23 [1] : vector<16x16xf32> to vector<16xf32>
    %43 = vector.shape_cast %42 : vector<16xf32> to vector<16x1xf32>
    %44 = vector.broadcast %43 : vector<16x1xf32> to vector<16x16xf32>
    %45 = arith.subf %41, %44 : vector<16x16xf32>
    %46 = math.exp %45 : vector<16x16xf32>
    %cst_24 = arith.constant dense<0.000000e+00> : vector<16xf32>
    %47 = vector.multi_reduction <add>, %46, %cst_24 [1] : vector<16x16xf32> to vector<16xf32>
    %48 = vector.shape_cast %47 : vector<16xf32> to vector<16x1xf32>
    %49 = vector.broadcast %48 : vector<16x1xf32> to vector<16x16xf32>
    %50 = arith.divf %46, %49 : vector<16x16xf32>
    %cst_25 = arith.constant dense<0.000000e+00> : vector<16x16xf32>
    %51 = tpu.matmul %38, %50, %cst_25 {dimension_numbers = #tpu.dot_dimension_numbers<[0], [1], [1], [0], [0, 1, 1, 0], [], []>} : vector<16x16xf32>, vector<16x16xf32>, vector<16x16xf32> -> vector<16x16xf32>
    %c1_26 = arith.constant 1 : index
    %c0_27 = arith.constant 0 : index
    %c0_28 = arith.constant 0 : index
    %52 = vector.load %arg4[%c1_26, %c0_27, %c0_28] : memref<2x16x16xf32, #tpu.memory_space<vmem>>, vector<1x16x16xf32>
    %53 = vector.shape_cast %52 : vector<1x16x16xf32> to vector<16x16xf32>
    %54 = vector.shape_cast %51 : vector<16x16xf32> to vector<1x16x16xf32>
    tpu.vector_store %arg4[%c1_26, %c0_27, %c0_28], %54 {strides = array<i32>} : memref<2x16x16xf32, #tpu.memory_space<vmem>>, vector<1x16x16xf32>,
    return
  }
  func.func @transform_0(%arg0: i32) -> (i32, i32, i32) {
    %c0_i32 = arith.constant 0 : i32
    %c0_i32_0 = arith.constant 0 : i32
    %c0_i32_1 = arith.constant 0 : i32
    %c0_i32_2 = arith.constant 0 : i32
    return %c0_i32, %c0_i32_0, %c0_i32_1 : i32, i32, i32
  }
  func.func @transform_1(%arg0: i32) -> (i32, i32, i32) {
    %c0_i32 = arith.constant 0 : i32
    %c0_i32_0 = arith.constant 0 : i32
    %c0_i32_1 = arith.constant 0 : i32
    %c0_i32_2 = arith.constant 0 : i32
    return %c0_i32, %c0_i32_0, %c0_i32_1 : i32, i32, i32
  }
  func.func @transform_2(%arg0: i32) -> (i32, i32) {
    %c0_i32 = arith.constant 0 : i32
    %c0_i32_0 = arith.constant 0 : i32
    %c0_i32_1 = arith.constant 0 : i32
    return %c0_i32, %c0_i32_0 : i32, i32
  }
  func.func @transform_3(%arg0: i32) -> (i32, i32, i32) {
    %c0_i32 = arith.constant 0 : i32
    %c0_i32_0 = arith.constant 0 : i32
    %c0_i32_1 = arith.constant 0 : i32
    %c0_i32_2 = arith.constant 0 : i32
    return %c0_i32, %c0_i32_0, %c0_i32_1 : i32, i32, i32
  }
}

</mosaic_0001>

<llo_original>
// kernel: tcn_attention.1
$region0: #{tcn_attention.1}
  #allocation0 [shape = 'u32[]', space=smem, size = 0x4, offset = 0x4, fixed_abs, tag = 'smem constant byte address 0x4 - core index']
  #allocation1 [shape = 'u32[144,128]{1,0:T(1,128)}', space=vmem, size = 0x12000, scoped, tag = 'internal scratch']
  %s0 = inlined_call_operand.vmem [shape: f32[2,12,16], index: 0, kind: input, shape index: {}]
  %s1 = inlined_call_operand.vmem [shape: f32[2,20,16], index: 1, kind: input, shape index: {}]
  %s2 = inlined_call_operand.vmem [shape: f32[48,33], index: 2, kind: input, shape index: {}]
  %s3 = inlined_call_operand.hbm [shape: f32[2,16,16], index: 3, kind: output, shape index: {}]
  %s4 = sld [smem:[#allocation0]]
  $region22: #{tcn_attention.1} parent=0
    _
  %s6 = ssub.s32 1, %s4
  %s7 = scalar_select 0, %s6, %s4
  $region1: #{tcn_attention.1} parent=0
    #allocation2 [shape = 'u8[16384]{0}', space=vmem, size = 0x4000, scoped, tag = 'output window, operand 0, single buffered']
    #allocation3 [shape = 's32[1]{0}', space=sflag, size = 0x4, scoped, tag = 'scoped memory for tcn_attention.1']
    %8 = vsyncpa [#allocation3], 0
    // Predicated region
    $region2: #{tcn_attention.1} parent=1 // pred_check
      _
    $region3: #{tcn_attention.1} parent=1 // pred_check_branch
      %10 = sbr.rel (0) target = $region5
    $region4: #{tcn_attention.1} parent=1 // pred_region
      _
    $region5: #{tcn_attention.1} parent=1 // pred_fallthru
      _
    // Predicated region
    $region6: #{tcn_attention.1} parent=1 // pred_check
      _
    $region7: #{tcn_attention.1} parent=1 // pred_check_branch
      %12 = sbr.rel (0) target = $region9
    $region8: #{tcn_attention.1} parent=1 // pred_region
      _
    $region9: #{tcn_attention.1} parent=1 // pred_fallthru
      _
    // Predicated region
    $region10: #{tcn_attention.1} parent=1 // pred_check
      _
    $region11: #{tcn_attention.1} parent=1 // pred_check_branch
      %14 = sbr.rel (0) target = $region13
    $region12: #{tcn_attention.1} parent=1 // pred_region
      _
    $region13: #{tcn_attention.1} parent=1 // pred_fallthru
      _
    %v15 = vld [vmem:[%s0] sm:$0xff]
    %v16 = vld [vmem:[%s0 + $0x8] sm:$0xf]
    %s17 = scalar_lea.vmem %s0, 16
    %v18 = vld [vmem:[%s17] sm:$0xff]
    %v19 = vld [vmem:[%s17 + $0x8] sm:$0xf]
    %22 = vrot.lane.b32.xlu0 %v18, 16
    %v23 = vpop.permute.xlu0 %22
    %24 = vrot.lane.b32.xlu0 %v19, 16
    %v25 = vpop.permute.xlu0 %24
    %vm28 = vcmask 130048
    %v29 = vsel %vm28, %v15, %v23
    %v30 = vsel %vm28, %v16, %v25
    %v31 = vld [vmem:[%s1] sm:$0xff]
    %v32 = vld [vmem:[%s1 + $0x8] sm:$0xff]
    %v33 = vld [vmem:[%s1 + $0x10] sm:$0xf]
    %s34 = scalar_lea.vmem %s1, 24
    %v35 = vld [vmem:[%s34] sm:$0xff]
    %v36 = vld [vmem:[%s34 + $0x8] sm:$0xff]
    %v37 = vld [vmem:[%s34 + $0x10] sm:$0xf]
    %41 = vrot.lane.b32.xlu0 %v35, 16
    %v42 = vpop.permute.xlu0 %41
    %43 = vrot.lane.b32.xlu0 %v36, 16
    %v44 = vpop.permute.xlu0 %43
    %45 = vrot.lane.b32.xlu0 %v37, 16
    %v46 = vpop.permute.xlu0 %45
    %v50 = vsel %vm28, %v31, %v42
    %v51 = vsel %vm28, %v32, %v44
    %v52 = vsel %vm28, %v33, %v46
    %vm56 = vcmask 1043456
    %v57 = vrot.slane %v50, 4
    %v58 = vrot.slane %v51, 4
    %v59 = vsel %vm56, %v57, %v58
    %v60 = vrot.slane %v52, 4
    %v61 = vsel %vm56, %v58, %v60
    %v65 = vsel %vm56, %v30, %v57
    %v66 = vld [vmem:[%s2] sm:$0xff]
    %v67 = vld [vmem:[%s2 + $0x8] sm:$0xff]
    %v68 = vld [vmem:[%s2 + $0x10] sm:$0xff]
    %v69 = vld [vmem:[%s2 + $0x18] sm:$0xff]
    %v70 = vld [vmem:[%s2 + $0x20] sm:$0xff]
    %v71 = vld [vmem:[%s2 + $0x28] sm:$0xff]
    %vm72 = vcmask 269312
    %v74 = vsel %vm72, %v66, 0
    %v77 = vsel %vm72, %v67, 0
    %v80 = vsel %vm72, %v68, 0
    %v83 = vsel %vm72, %v69, 0
    %v86 = vsel %vm72, %v70, 0
    %v89 = vsel %vm72, %v71, 0
    %vm91 = vcmask 1040384
    %v93 = vsel %vm91, 1.0, 0
    %95 = vmatprep.subr.mxu0 0.0
    %96 = vmatpush1.msra.mxu0 0.0
    %97 = vmatprep.subr.mxu0 0.0
    %98 = vmatpush1.msra.mxu0 0.0
    %99 = vmatprep.subr.mxu0 0.0
    %100 = vmatpush1.msra.mxu0 0.0
    %101 = vmatprep.subr.mxu0 0.0
    %102 = vmatpush1.msra.mxu0 0.0
    %103 = vmatprep.subr.mxu0 0.0
    %104 = vmatpush1.msra.mxu0 0.0
    %105 = vmatprep.subr.mxu0 0.0
    %106 = vmatpush1.msra.mxu0 0.0
    %107 = vmatprep.subr.mxu0 0.0
    %108 = vmatpush1.msra.mxu0 0.0
    %109 = vmatprep.subr.mxu0 0.0
    %110 = vmatpush1.msra.mxu0 0.0
    %111 = vmatprep.subr.mxu0 0.0
    %112 = vmatpush1.msra.mxu0 0.0
    %113 = vmatprep.subr.mxu0 0.0
    %114 = vmatpush1.msra.mxu0 0.0
    %115 = vmatprep.subr.mxu0 0.0
    %116 = vmatpush1.msra.mxu0 0.0
    %117 = vmatprep.subr.mxu0 0.0
    %118 = vmatpush1.msra.mxu0 %v93
    %119 = vmatprep.subr.mxu0 0.0
    %120 = vmatpush1.msra.mxu0 %v61
    %121 = vmatprep.subr.mxu0 0.0
    %122 = vmatpush1.msra.mxu0 %v59
    %123 = vmatprep.subr.mxu0 0.0
    %124 = vmatpush1.msra.mxu0 %v65
    %125 = vmatprep.subr.mxu0 0.0
    %126 = vmatpush1.msra.mxu0 %v29
    %127 = vmatprep.subr.mxu0 0.0
    %128 = vmatpush2.msra.mxu0 0.0
    %129 = vmatprep.subr.mxu0 0.0
    %130 = vmatpush2.msra.mxu0 0.0
    %131 = vmatprep.subr.mxu0 0.0
    %132 = vmatpush2.msra.mxu0 0.0
    %133 = vmatprep.subr.mxu0 0.0
    %134 = vmatpush2.msra.mxu0 0.0
    %135 = vmatprep.subr.mxu0 0.0
    %136 = vmatpush2.msra.mxu0 0.0
    %137 = vmatprep.subr.mxu0 0.0
    %138 = vmatpush2.msra.mxu0 0.0
    %139 = vmatprep.subr.mxu0 0.0
    %140 = vmatpush2.msra.mxu0 0.0
    %141 = vmatprep.subr.mxu0 0.0
    %142 = vmatpush2.msra.mxu0 0.0
    %143 = vmatprep.subr.mxu0 0.0
    %144 = vmatpush2.msra.mxu0 0.0
    %145 = vmatprep.subr.mxu0 0.0
    %146 = vmatpush2.msra.mxu0 0.0
    %147 = vmatprep.subr.mxu0 0.0
    %148 = vmatpush2.msra.mxu0 0.0
    %149 = vmatprep.subr.mxu0 0.0
    %150 = vmatpush2.msra.mxu0 0.0
    %151 = vmatprep.subr.mxu0 0.0
    %152 = vmatpush2.msra.mxu0 0.0
    %153 = vmatprep.subr.mxu0 0.0
    %154 = vmatpush2.msra.mxu0 0.0
    %155 = vmatprep.subr.mxu0 0.0
    %156 = vmatpush2.msra.mxu0 0.0
    %157 = vmatprep.subr.mxu0 0.0
    %158 = vmatpush2.msra.mxu0 0.0
    %159 = vmatprep.mubr.f32.mxu0 0.0
    %160 = vmatmul.mubr.f32.gmra.mxu0 %v74
    %v161 = vpop.f32.mrf.mxu0
    %v162 = vadd.f32 0.0, %v161
    %v163 = vpop.f32.mrf.mxu0
    %164 = vmatprep.mubr.f32.mxu0 0.0
    %165 = vmatmul.mubr.f32.gmra.mxu0 %v77
    %v166 = vpop.f32.mrf.mxu0
    %v167 = vadd.f32 0.0, %v166
    %v168 = vpop.f32.mrf.mxu0
    %169 = vmatprep.mubr.f32.mxu0 0.0
    %170 = vmatmul.mubr.f32.gmra.mxu0 %v80
    %v171 = vpop.f32.mrf.mxu0
    %v172 = vadd.f32 0.0, %v171
    %v173 = vpop.f32.mrf.mxu0
    %174 = vmatprep.mubr.f32.mxu0 0.0
    %175 = vmatmul.mubr.f32.gmra.mxu0 %v83
    %v176 = vpop.f32.mrf.mxu0
    %v177 = vadd.f32 0.0, %v176
    %v178 = vpop.f32.mrf.mxu0
    %179 = vmatprep.mubr.f32.mxu0 0.0
    %180 = vmatmul.mubr.f32.gmra.mxu0 %v86
    %v181 = vpop.f32.mrf.mxu0
    %v182 = vadd.f32 0.0, %v181
    %v183 = vpop.f32.mrf.mxu0
    %184 = vmatprep.mubr.f32.mxu0 0.0
    %185 = vmatmul.mubr.f32.gmra.mxu0 %v89
    %v186 = vpop.f32.mrf.mxu0
    %v187 = vadd.f32 0.0, %v186
    %v188 = vpop.f32.mrf.mxu0
    %189 = vdwg.mxu0
    %v191 = vsel %vm28, %v162, 0
    %v194 = vsel %vm28, %v167, 0
    %v197 = vsel %vm28, %v172, 0
    %v200 = vsel %vm28, %v177, 0
    %202 = vmatprep.subr.mxu0 0.0
    %203 = vmatpush1.xpose.msra.mxu0 0.0
    %204 = vmatprep.subr.mxu0 0.0
    %205 = vmatpush1.xpose.msra.mxu0 0.0
    %206 = vmatprep.subr.mxu0 0.0
    %207 = vmatpush1.xpose.msra.mxu0 0.0
    %208 = vmatprep.subr.mxu0 0.0
    %209 = vmatpush1.xpose.msra.mxu0 0.0
    %210 = vmatprep.subr.mxu0 0.0
    %211 = vmatpush1.xpose.msra.mxu0 0.0
    %212 = vmatprep.subr.mxu0 0.0
    %213 = vmatpush1.xpose.msra.mxu0 0.0
    %214 = vmatprep.subr.mxu0 0.0
    %215 = vmatpush1.xpose.msra.mxu0 0.0
    %216 = vmatprep.subr.mxu0 0.0
    %217 = vmatpush1.xpose.msra.mxu0 0.0
    %218 = vmatprep.subr.mxu0 0.0
    %219 = vmatpush1.xpose.msra.mxu0 0.0
    %220 = vmatprep.subr.mxu0 0.0
    %221 = vmatpush1.xpose.msra.mxu0 0.0
    %222 = vmatprep.subr.mxu0 0.0
    %223 = vmatpush1.xpose.msra.mxu0 0.0
    %224 = vmatprep.subr.mxu0 0.0
    %225 = vmatpush1.xpose.msra.mxu0 0.0
    %226 = vmatprep.subr.mxu0 0.0
    %227 = vmatpush1.xpose.msra.mxu0 0.0
    %228 = vmatprep.subr.mxu0 0.0
    %229 = vmatpush1.xpose.msra.mxu0 0.0
    %230 = vmatprep.subr.mxu0 0.0
    %231 = vmatpush1.xpose.msra.mxu0 %v200
    %232 = vmatprep.subr.mxu0 0.0
    %233 = vmatpush1.xpose.msra.mxu0 %v197
    %234 = vmatprep.subr.mxu0 0.0
    %235 = vmatpush2.xpose.msra.mxu0 0.0
    %236 = vmatprep.subr.mxu0 0.0
    %237 = vmatpush2.xpose.msra.mxu0 0.0
    %238 = vmatprep.subr.mxu0 0.0
    %239 = vmatpush2.xpose.msra.mxu0 0.0
    %240 = vmatprep.subr.mxu0 0.0
    %241 = vmatpush2.xpose.msra.mxu0 0.0
    %242 = vmatprep.subr.mxu0 0.0
    %243 = vmatpush2.xpose.msra.mxu0 0.0
    %244 = vmatprep.subr.mxu0 0.0
    %245 = vmatpush2.xpose.msra.mxu0 0.0
    %246 = vmatprep.subr.mxu0 0.0
    %247 = vmatpush2.xpose.msra.mxu0 0.0
    %248 = vmatprep.subr.mxu0 0.0
    %249 = vmatpush2.xpose.msra.mxu0 0.0
    %250 = vmatprep.subr.mxu0 0.0
    %251 = vmatpush2.xpose.msra.mxu0 0.0
    %252 = vmatprep.subr.mxu0 0.0
    %253 = vmatpush2.xpose.msra.mxu0 0.0
    %254 = vmatprep.subr.mxu0 0.0
    %255 = vmatpush2.xpose.msra.mxu0 0.0
    %256 = vmatprep.subr.mxu0 0.0
    %257 = vmatpush2.xpose.msra.mxu0 0.0
    %258 = vmatprep.subr.mxu0 0.0
    %259 = vmatpush2.xpose.msra.mxu0 0.0
    %260 = vmatprep.subr.mxu0 0.0
    %261 = vmatpush2.xpose.msra.mxu0 0.0
    %262 = vmatprep.subr.mxu0 0.0
    %263 = vmatpush2.xpose.msra.mxu0 0.0
    %264 = vmatprep.subr.mxu0 0.0
    %265 = vmatpush2.xpose.msra.mxu0 0.0
    %266 = vmatprep.mubr.f32.mxu0 0.0
    %267 = vmatmul.mubr.f32.gmra.mxu0 %v191
    %v268 = vpop.f32.mrf.mxu0
    %v269 = vadd.f32 0.0, %v268
    %v270 = vpop.f32.mrf.mxu0
    %271 = vmatprep.mubr.f32.mxu0 0.0
    %272 = vmatmul.mubr.f32.gmra.mxu0 %v194
    %v273 = vpop.f32.mrf.mxu0
    %v274 = vadd.f32 0.0, %v273
    %v275 = vpop.f32.mrf.mxu0
    %276 = vdwg.mxu0
    %v277 = vmul.f32 %v269, 0.25
    %v278 = vmul.f32 %v274, 0.25
    %v279 = vsel %vm28, %v277, -inf
    %280 = vmax.xlane.f32.xlu0 %v279
    %v281 = vpop.xlane.xlu0 %280
    %v282 = vsel %vm28, %v278, -inf
    %283 = vmax.xlane.f32.xlu0 %v282
    %v284 = vpop.xlane.xlu0 %283
    %v285 = vsub.f32 %v277, %v281
    %v286 = vsub.f32 %v278, %v284
    %v287 = vmul.f32 %v285, 1.442695
    %v288 = vpow.pop %v287
    %v289 = vmul.f32 %v286, 1.442695
    %v290 = vpow.pop %v289
    %v291 = vsel %vm28, %v288, 0.0
    %292 = vadd.xlane.f32.xlu0 %v291
    %v293 = vpop.xlane.xlu0 %292
    %v294 = vsel %vm28, %v290, 0.0
    %295 = vadd.xlane.f32.xlu0 %v294
    %v296 = vpop.xlane.xlu0 %295
    %v297 = vrcp.pop %v293
    %v298 = vmul.f32 %v288, %v297
    %v299 = vrcp.pop %v296
    %v300 = vmul.f32 %v290, %v299
    %301 = vxpose.xlu0.b32.start [1/16] %v182, 128
    %302 = vxpose.xlu0.b32.cont [2/16] %v187, 128
    %303 = vxpose.xlu0.b32.cont [3/16] 0.0, 128
    %304 = vxpose.xlu0.b32.cont [4/16] 0.0, 128
    %305 = vxpose.xlu0.b32.cont [5/16] 0.0, 128
    %306 = vxpose.xlu0.b32.cont [6/16] 0.0, 128
    %307 = vxpose.xlu0.b32.cont [7/16] 0.0, 128
    %308 = vxpose.xlu0.b32.cont [8/16] 0.0, 128
    %309 = vxpose.xlu0.b32.cont [9/16] 0.0, 128
    %310 = vxpose.xlu0.b32.cont [10/16] 0.0, 128
    %311 = vxpose.xlu0.b32.cont [11/16] 0.0, 128
    %312 = vxpose.xlu0.b32.cont [12/16] 0.0, 128
    %313 = vxpose.xlu0.b32.cont [13/16] 0.0, 128
    %314 = vxpose.xlu0.b32.cont [14/16] 0.0, 128
    %315 = vxpose.xlu0.b32.cont [15/16] 0.0, 128
    %316 = vxpose.xlu0.b32.end [16/16] 0.0, 128
    %v317 = vpop.trf.xlu0
    %v318 = vpop.trf.xlu0
    %v319 = vpop.trf.xlu0
    %v320 = vpop.trf.xlu0
    %v321 = vpop.trf.xlu0
    %v322 = vpop.trf.xlu0
    %v323 = vpop.trf.xlu0
    %v324 = vpop.trf.xlu0
    %v325 = vpop.trf.xlu0
    %v326 = vpop.trf.xlu0
    %v327 = vpop.trf.xlu0
    %v328 = vpop.trf.xlu0
    %v329 = vpop.trf.xlu0
    %v330 = vpop.trf.xlu0
    %v331 = vpop.trf.xlu0
    %v332 = vpop.trf.xlu0
    %v334 = vsel %vm28, %v317, 0
    %v337 = vsel %vm28, %v318, 0
    %v340 = vsel %vm28, %v298, 0
    %v343 = vsel %vm28, %v300, 0
    %345 = vmatprep.subr.mxu0 0.0
    %346 = vmatpush1.xpose.msra.mxu0 0.0
    %347 = vmatprep.subr.mxu0 0.0
    %348 = vmatpush1.xpose.msra.mxu0 0.0
    %349 = vmatprep.subr.mxu0 0.0
    %350 = vmatpush1.xpose.msra.mxu0 0.0
    %351 = vmatprep.subr.mxu0 0.0
    %352 = vmatpush1.xpose.msra.mxu0 0.0
    %353 = vmatprep.subr.mxu0 0.0
    %354 = vmatpush1.xpose.msra.mxu0 0.0
    %355 = vmatprep.subr.mxu0 0.0
    %356 = vmatpush1.xpose.msra.mxu0 0.0
    %357 = vmatprep.subr.mxu0 0.0
    %358 = vmatpush1.xpose.msra.mxu0 0.0
    %359 = vmatprep.subr.mxu0 0.0
    %360 = vmatpush1.xpose.msra.mxu0 0.0
    %361 = vmatprep.subr.mxu0 0.0
    %362 = vmatpush1.xpose.msra.mxu0 0.0
    %363 = vmatprep.subr.mxu0 0.0
    %364 = vmatpush1.xpose.msra.mxu0 0.0
    %365 = vmatprep.subr.mxu0 0.0
    %366 = vmatpush1.xpose.msra.mxu0 0.0
    %367 = vmatprep.subr.mxu0 0.0
    %368 = vmatpush1.xpose.msra.mxu0 0.0
    %369 = vmatprep.subr.mxu0 0.0
    %370 = vmatpush1.xpose.msra.mxu0 0.0
    %371 = vmatprep.subr.mxu0 0.0
    %372 = vmatpush1.xpose.msra.mxu0 0.0
    %373 = vmatprep.subr.mxu0 0.0
    %374 = vmatpush1.xpose.msra.mxu0 %v343
    %375 = vmatprep.subr.mxu0 0.0
    %376 = vmatpush1.xpose.msra.mxu0 %v340
    %377 = vmatprep.subr.mxu0 0.0
    %378 = vmatpush2.xpose.msra.mxu0 0.0
    %379 = vmatprep.subr.mxu0 0.0
    %380 = vmatpush2.xpose.msra.mxu0 0.0
    %381 = vmatprep.subr.mxu0 0.0
    %382 = vmatpush2.xpose.msra.mxu0 0.0
    %383 = vmatprep.subr.mxu0 0.0
    %384 = vmatpush2.xpose.msra.mxu0 0.0
    %385 = vmatprep.subr.mxu0 0.0
    %386 = vmatpush2.xpose.msra.mxu0 0.0
    %387 = vmatprep.subr.mxu0 0.0
    %388 = vmatpush2.xpose.msra.mxu0 0.0
    %389 = vmatprep.subr.mxu0 0.0
    %390 = vmatpush2.xpose.msra.mxu0 0.0
    %391 = vmatprep.subr.mxu0 0.0
    %392 = vmatpush2.xpose.msra.mxu0 0.0
    %393 = vmatprep.subr.mxu0 0.0
    %394 = vmatpush2.xpose.msra.mxu0 0.0
    %395 = vmatprep.subr.mxu0 0.0
    %396 = vmatpush2.xpose.msra.mxu0 0.0
    %397 = vmatprep.subr.mxu0 0.0
    %398 = vmatpush2.xpose.msra.mxu0 0.0
    %399 = vmatprep.subr.mxu0 0.0
    %400 = vmatpush2.xpose.msra.mxu0 0.0
    %401 = vmatprep.subr.mxu0 0.0
    %402 = vmatpush2.xpose.msra.mxu0 0.0
    %403 = vmatprep.subr.mxu0 0.0
    %404 = vmatpush2.xpose.msra.mxu0 0.0
    %405 = vmatprep.subr.mxu0 0.0
    %406 = vmatpush2.xpose.msra.mxu0 0.0
    %407 = vmatprep.subr.mxu0 0.0
    %408 = vmatpush2.xpose.msra.mxu0 0.0
    %409 = vmatprep.mubr.f32.mxu0 0.0
    %410 = vmatmul.mubr.f32.gmra.mxu0 %v334
    %v411 = vpop.f32.mrf.mxu0
    %v412 = vadd.f32 0.0, %v411
    %v413 = vpop.f32.mrf.mxu0
    %414 = vmatprep.mubr.f32.mxu0 0.0
    %415 = vmatmul.mubr.f32.gmra.mxu0 %v337
    %v416 = vpop.f32.mrf.mxu0
    %v417 = vadd.f32 0.0, %v416
    %v418 = vpop.f32.mrf.mxu0
    %419 = vdwg.mxu0
    %420 = vst.msk [vmem:[#allocation2] sm:$0xff] %vm28, %v412
    %421 = vst.msk [vmem:[#allocation2 + $0x8] sm:$0xff] %vm28, %v417
    %422 = vrot.lane.b32.xlu0 %v162, 112
    %v423 = vpop.permute.xlu0 %422
    %424 = vrot.lane.b32.xlu0 %v167, 112
    %v425 = vpop.permute.xlu0 %424
    %426 = vrot.lane.b32.xlu0 %v172, 112
    %v427 = vpop.permute.xlu0 %426
    %428 = vrot.lane.b32.xlu0 %v177, 112
    %v429 = vpop.permute.xlu0 %428
    %v430 = vsel %vm28, %v423, 0
    %v432 = vsel %vm28, %v425, 0
    %v434 = vsel %vm28, %v427, 0
    %v436 = vsel %vm28, %v429, 0
    %438 = vmatprep.subr.mxu0 0.0
    %439 = vmatpush1.xpose.msra.mxu0 0.0
    %440 = vmatprep.subr.mxu0 0.0
    %441 = vmatpush1.xpose.msra.mxu0 0.0
    %442 = vmatprep.subr.mxu0 0.0
    %443 = vmatpush1.xpose.msra.mxu0 0.0
    %444 = vmatprep.subr.mxu0 0.0
    %445 = vmatpush1.xpose.msra.mxu0 0.0
    %446 = vmatprep.subr.mxu0 0.0
    %447 = vmatpush1.xpose.msra.mxu0 0.0
    %448 = vmatprep.subr.mxu0 0.0
    %449 = vmatpush1.xpose.msra.mxu0 0.0
    %450 = vmatprep.subr.mxu0 0.0
    %451 = vmatpush1.xpose.msra.mxu0 0.0
    %452 = vmatprep.subr.mxu0 0.0
    %453 = vmatpush1.xpose.msra.mxu0 0.0
    %454 = vmatprep.subr.mxu0 0.0
    %455 = vmatpush1.xpose.msra.mxu0 0.0
    %456 = vmatprep.subr.mxu0 0.0
    %457 = vmatpush1.xpose.msra.mxu0 0.0
    %458 = vmatprep.subr.mxu0 0.0
    %459 = vmatpush1.xpose.msra.mxu0 0.0
    %460 = vmatprep.subr.mxu0 0.0
    %461 = vmatpush1.xpose.msra.mxu0 0.0
    %462 = vmatprep.subr.mxu0 0.0
    %463 = vmatpush1.xpose.msra.mxu0 0.0
    %464 = vmatprep.subr.mxu0 0.0
    %465 = vmatpush1.xpose.msra.mxu0 0.0
    %466 = vmatprep.subr.mxu0 0.0
    %467 = vmatpush1.xpose.msra.mxu0 %v436
    %468 = vmatprep.subr.mxu0 0.0
    %469 = vmatpush1.xpose.msra.mxu0 %v434
    %470 = vmatprep.subr.mxu0 0.0
    %471 = vmatpush2.xpose.msra.mxu0 0.0
    %472 = vmatprep.subr.mxu0 0.0
    %473 = vmatpush2.xpose.msra.mxu0 0.0
    %474 = vmatprep.subr.mxu0 0.0
    %475 = vmatpush2.xpose.msra.mxu0 0.0
    %476 = vmatprep.subr.mxu0 0.0
    %477 = vmatpush2.xpose.msra.mxu0 0.0
    %478 = vmatprep.subr.mxu0 0.0
    %479 = vmatpush2.xpose.msra.mxu0 0.0
    %480 = vmatprep.subr.mxu0 0.0
    %481 = vmatpush2.xpose.msra.mxu0 0.0
    %482 = vmatprep.subr.mxu0 0.0
    %483 = vmatpush2.xpose.msra.mxu0 0.0
    %484 = vmatprep.subr.mxu0 0.0
    %485 = vmatpush2.xpose.msra.mxu0 0.0
    %486 = vmatprep.subr.mxu0 0.0
    %487 = vmatpush2.xpose.msra.mxu0 0.0
    %488 = vmatprep.subr.mxu0 0.0
    %489 = vmatpush2.xpose.msra.mxu0 0.0
    %490 = vmatprep.subr.mxu0 0.0
    %491 = vmatpush2.xpose.msra.mxu0 0.0
    %492 = vmatprep.subr.mxu0 0.0
    %493 = vmatpush2.xpose.msra.mxu0 0.0
    %494 = vmatprep.subr.mxu0 0.0
    %495 = vmatpush2.xpose.msra.mxu0 0.0
    %496 = vmatprep.subr.mxu0 0.0
    %497 = vmatpush2.xpose.msra.mxu0 0.0
    %498 = vmatprep.subr.mxu0 0.0
    %499 = vmatpush2.xpose.msra.mxu0 0.0
    %500 = vmatprep.subr.mxu0 0.0
    %501 = vmatpush2.xpose.msra.mxu0 0.0
    %502 = vmatprep.mubr.f32.mxu0 0.0
    %503 = vmatmul.mubr.f32.gmra.mxu0 %v430
    %v504 = vpop.f32.mrf.mxu0
    %v505 = vadd.f32 0.0, %v504
    %v506 = vpop.f32.mrf.mxu0
    %507 = vmatprep.mubr.f32.mxu0 0.0
    %508 = vmatmul.mubr.f32.gmra.mxu0 %v432
    %v509 = vpop.f32.mrf.mxu0
    %v510 = vadd.f32 0.0, %v509
    %v511 = vpop.f32.mrf.mxu0
    %512 = vdwg.mxu0
    %v513 = vmul.f32 %v505, 0.25
    %v514 = vmul.f32 %v510, 0.25
    %v515 = vsel %vm28, %v513, -inf
    %516 = vmax.xlane.f32.xlu0 %v515
    %v517 = vpop.xlane.xlu0 %516
    %v518 = vsel %vm28, %v514, -inf
    %519 = vmax.xlane.f32.xlu0 %v518
    %v520 = vpop.xlane.xlu0 %519
    %v521 = vsub.f32 %v513, %v517
    %v522 = vsub.f32 %v514, %v520
    %v523 = vmul.f32 %v521, 1.442695
    %v524 = vpow.pop %v523
    %v525 = vmul.f32 %v522, 1.442695
    %v526 = vpow.pop %v525
    %v527 = vsel %vm28, %v524, 0.0
    %528 = vadd.xlane.f32.xlu0 %v527
    %v529 = vpop.xlane.xlu0 %528
    %v530 = vsel %vm28, %v526, 0.0
    %531 = vadd.xlane.f32.xlu0 %v530
    %v532 = vpop.xlane.xlu0 %531
    %v533 = vrcp.pop %v529
    %v534 = vmul.f32 %v524, %v533
    %v535 = vrcp.pop %v532
    %v536 = vmul.f32 %v526, %v535
    %539 = vrot.lane.b32.xlu0 %v182, 112
    %v540 = vpop.permute.xlu0 %539
    %541 = vrot.lane.b32.xlu0 %v187, 112
    %v542 = vpop.permute.xlu0 %541
    %545 = vxpose.xlu0.b32.start [1/16] %v540, 128
    %546 = vxpose.xlu0.b32.cont [2/16] %v542, 128
    %547 = vxpose.xlu0.b32.cont [3/16] 0.0, 128
    %548 = vxpose.xlu0.b32.cont [4/16] 0.0, 128
    %549 = vxpose.xlu0.b32.cont [5/16] 0.0, 128
    %550 = vxpose.xlu0.b32.cont [6/16] 0.0, 128
    %551 = vxpose.xlu0.b32.cont [7/16] 0.0, 128
    %552 = vxpose.xlu0.b32.cont [8/16] 0.0, 128
    %553 = vxpose.xlu0.b32.cont [9/16] 0.0, 128
    %554 = vxpose.xlu0.b32.cont [10/16] 0.0, 128
    %555 = vxpose.xlu0.b32.cont [11/16] 0.0, 128
    %556 = vxpose.xlu0.b32.cont [12/16] 0.0, 128
    %557 = vxpose.xlu0.b32.cont [13/16] 0.0, 128
    %558 = vxpose.xlu0.b32.cont [14/16] 0.0, 128
    %559 = vxpose.xlu0.b32.cont [15/16] 0.0, 128
    %560 = vxpose.xlu0.b32.end [16/16] 0.0, 128
    %v561 = vpop.trf.xlu0
    %v562 = vpop.trf.xlu0
    %v563 = vpop.trf.xlu0
    %v564 = vpop.trf.xlu0
    %v565 = vpop.trf.xlu0
    %v566 = vpop.trf.xlu0
    %v567 = vpop.trf.xlu0
    %v568 = vpop.trf.xlu0
    %v569 = vpop.trf.xlu0
    %v570 = vpop.trf.xlu0
    %v571 = vpop.trf.xlu0
    %v572 = vpop.trf.xlu0
    %v573 = vpop.trf.xlu0
    %v574 = vpop.trf.xlu0
    %v575 = vpop.trf.xlu0
    %v576 = vpop.trf.xlu0
    %v578 = vsel %vm28, %v561, 0
    %v581 = vsel %vm28, %v562, 0
    %v584 = vsel %vm28, %v534, 0
    %v587 = vsel %vm28, %v536, 0
    %589 = vmatprep.subr.mxu0 0.0
    %590 = vmatpush1.xpose.msra.mxu0 0.0
    %591 = vmatprep.subr.mxu0 0.0
    %592 = vmatpush1.xpose.msra.mxu0 0.0
    %593 = vmatprep.subr.mxu0 0.0
    %594 = vmatpush1.xpose.msra.mxu0 0.0
    %595 = vmatprep.subr.mxu0 0.0
    %596 = vmatpush1.xpose.msra.mxu0 0.0
    %597 = vmatprep.subr.mxu0 0.0
    %598 = vmatpush1.xpose.msra.mxu0 0.0
    %599 = vmatprep.subr.mxu0 0.0
    %600 = vmatpush1.xpose.msra.mxu0 0.0
    %601 = vmatprep.subr.mxu0 0.0
    %602 = vmatpush1.xpose.msra.mxu0 0.0
    %603 = vmatprep.subr.mxu0 0.0
    %604 = vmatpush1.xpose.msra.mxu0 0.0
    %605 = vmatprep.subr.mxu0 0.0
    %606 = vmatpush1.xpose.msra.mxu0 0.0
    %607 = vmatprep.subr.mxu0 0.0
    %608 = vmatpush1.xpose.msra.mxu0 0.0
    %609 = vmatprep.subr.mxu0 0.0
    %610 = vmatpush1.xpose.msra.mxu0 0.0
    %611 = vmatprep.subr.mxu0 0.0
    %612 = vmatpush1.xpose.msra.mxu0 0.0
    %613 = vmatprep.subr.mxu0 0.0
    %614 = vmatpush1.xpose.msra.mxu0 0.0
    %615 = vmatprep.subr.mxu0 0.0
    %616 = vmatpush1.xpose.msra.mxu0 0.0
    %617 = vmatprep.subr.mxu0 0.0
    %618 = vmatpush1.xpose.msra.mxu0 %v587
    %619 = vmatprep.subr.mxu0 0.0
    %620 = vmatpush1.xpose.msra.mxu0 %v584
    %621 = vmatprep.subr.mxu0 0.0
    %622 = vmatpush2.xpose.msra.mxu0 0.0
    %623 = vmatprep.subr.mxu0 0.0
    %624 = vmatpush2.xpose.msra.mxu0 0.0
    %625 = vmatprep.subr.mxu0 0.0
    %626 = vmatpush2.xpose.msra.mxu0 0.0
    %627 = vmatprep.subr.mxu0 0.0
    %628 = vmatpush2.xpose.msra.mxu0 0.0
    %629 = vmatprep.subr.mxu0 0.0
    %630 = vmatpush2.xpose.msra.mxu0 0.0
    %631 = vmatprep.subr.mxu0 0.0
    %632 = vmatpush2.xpose.msra.mxu0 0.0
    %633 = vmatprep.subr.mxu0 0.0
    %634 = vmatpush2.xpose.msra.mxu0 0.0
    %635 = vmatprep.subr.mxu0 0.0
    %636 = vmatpush2.xpose.msra.mxu0 0.0
    %637 = vmatprep.subr.mxu0 0.0
    %638 = vmatpush2.xpose.msra.mxu0 0.0
    %639 = vmatprep.subr.mxu0 0.0
    %640 = vmatpush2.xpose.msra.mxu0 0.0
    %641 = vmatprep.subr.mxu0 0.0
    %642 = vmatpush2.xpose.msra.mxu0 0.0
    %643 = vmatprep.subr.mxu0 0.0
    %644 = vmatpush2.xpose.msra.mxu0 0.0
    %645 = vmatprep.subr.mxu0 0.0
    %646 = vmatpush2.xpose.msra.mxu0 0.0
    %647 = vmatprep.subr.mxu0 0.0
    %648 = vmatpush2.xpose.msra.mxu0 0.0
    %649 = vmatprep.subr.mxu0 0.0
    %650 = vmatpush2.xpose.msra.mxu0 0.0
    %651 = vmatprep.subr.mxu0 0.0
    %652 = vmatpush2.xpose.msra.mxu0 0.0
    %653 = vmatprep.mubr.f32.mxu0 0.0
    %654 = vmatmul.mubr.f32.gmra.mxu0 %v578
    %v655 = vpop.f32.mrf.mxu0
    %v656 = vadd.f32 0.0, %v655
    %v657 = vpop.f32.mrf.mxu0
    %658 = vmatprep.mubr.f32.mxu0 0.0
    %659 = vmatmul.mubr.f32.gmra.mxu0 %v581
    %v660 = vpop.f32.mrf.mxu0
    %v661 = vadd.f32 0.0, %v660
    %v662 = vpop.f32.mrf.mxu0
    %663 = vdwg.mxu0
    %s664 = scalar_lea.vmem [#allocation2], 16
    %665 = vst.msk [vmem:[%s664] sm:$0xff] %vm28, %v656
    %666 = vst.msk [vmem:[%s664 + $0x8] sm:$0xff] %vm28, %v661
    // Predicated region
    $region14: #{tcn_attention.1} parent=1 // pred_check
      _
    $region15: #{tcn_attention.1} parent=1 // pred_check_branch
      %668 = sbr.rel (0) target = $region17
    $region16: #{tcn_attention.1} parent=1 // pred_region
      %s670 = ssub.s32 512, 512
      %671 = vsyncadd [#allocation3], %s670
      %s672 = sshll.u32 [#allocation2], 4
      %s673 = int_to_ptr.vmem [resolvable:$true] %s672
      %678 = dma.vmem_to_hbm [thread:$0]  %s673, 512, %s3, [#allocation3], 128, 128, 8
    $region17: #{tcn_attention.1} parent=1 // pred_fallthru
      _
    // Predicated region
    $region18: #{tcn_attention.1} parent=1 // pred_check
      _
    $region19: #{tcn_attention.1} parent=1 // pred_check_branch
      %680 = sbr.rel (0) target = $region21
    $region20: #{tcn_attention.1} parent=1 // pred_region
      %681 = dma.done [#allocation3], 512
    $region21: #{tcn_attention.1} parent=1 // pred_fallthru
      _
    %682 = vsyncpa [#allocation3], 1

</llo_original>
